<compile_context>
chip_gen: v7x
topology: tpu7x:2x2x1
jax: 0.10.0
libtpu: 0.0.40
codegen_flags: <defaults>
</compile_context>

<pallas_src>
import functools

import jax
import jax.numpy as jnp
from jax import lax
from jax.experimental import pallas as pl
from jax.experimental.pallas import tpu as pltpu

_LANES = 128


def _cdiv(a, b):
    return -(-a // b)


def _adaptive_weighted_loss_kernel(x_ref, a_ref, b_ref, out_ref, *,
                                   num_classes, hw, block_pixels, needs_mask):
    # Ref blocks: x/a/b -> (C, rows, 128); out -> (3, 8, 128) partial sums.
    rows = x_ref.shape[1]
    shape = (rows, _LANES)

    def ld(ref, c):
        return ref[c].astype(jnp.float32)

    # ---- pass 1: running channel max (x, a, b) + running argmax (a -> p1, b -> p2).
    # Strict '>' update == first-max tie break, matching jnp.argmax / reference.
    xmax = ld(x_ref, 0)
    amax = ld(a_ref, 0)
    bmax = ld(b_ref, 0)
    p1 = jnp.zeros(shape, jnp.int32)
    p2 = jnp.zeros(shape, jnp.int32)
    for c in range(1, num_classes):
        xmax = jnp.maximum(xmax, ld(x_ref, c))
        ac = ld(a_ref, c)
        upd = ac > amax
        amax = jnp.where(upd, ac, amax)
        p1 = jnp.where(upd, c, p1)
        bc = ld(b_ref, c)
        upd = bc > bmax
        bmax = jnp.where(upd, bc, bmax)
        p2 = jnp.where(upd, c, p2)

    # ---- pass 2: softmax denominators (a, b) and logsumexp numerator (x).
    xsum = jnp.zeros(shape, jnp.float32)
    asum = jnp.zeros(shape, jnp.float32)
    bsum = jnp.zeros(shape, jnp.float32)
    for c in range(num_classes):
        xsum = xsum + jnp.exp(ld(x_ref, c) - xmax)
        asum = asum + jnp.exp(ld(a_ref, c) - amax)
        bsum = bsum + jnp.exp(ld(b_ref, c) - bmax)
    a_inv = 1.0 / asum          # exact 1/x (not approx) so near-tie argmax can't flip
    b_inv = 1.0 / bsum
    lse_x = xmax + jnp.log(xsum)

    # ---- pass 3: pseudo-label argmax over softmax(a)+softmax(b), carrying the
    # x-logit of the current best channel so no gather by label index is needed.
    comb_best = (jnp.exp(ld(a_ref, 0) - amax) * a_inv +
                 jnp.exp(ld(b_ref, 0) - bmax) * b_inv)
    picked = ld(x_ref, 0)
    for c in range(1, num_classes):
        comb_c = (jnp.exp(ld(a_ref, c) - amax) * a_inv +
                  jnp.exp(ld(b_ref, c) - bmax) * b_inv)
        upd = comb_c > comb_best
        comb_best = jnp.where(upd, comb_c, comb_best)
        picked = jnp.where(upd, ld(x_ref, c), picked)

    ce = lse_x - picked                                        # per-pixel CE
    inter = ((p1 > 0) & (p1 == p2)).astype(jnp.float32)
    union = ((p1 > 0) | (p2 > 0)).astype(jnp.float32)

    if needs_mask:
        # Zero the contributions of the zero-padded tail pixels.
        i = pl.program_id(1)
        r_ids = lax.broadcasted_iota(jnp.int32, shape, 0)
        l_ids = lax.broadcasted_iota(jnp.int32, shape, 1)
        valid = ((i * block_pixels + r_ids * _LANES + l_ids) < hw)
        valid = valid.astype(jnp.float32)
        ce = ce * valid
        inter = inter * valid
        union = union * valid

    # ---- fold (rows, 128) -> (8, 128): sum over the leading (vreg-group) axis is
    # pure VPU vreg adds; the final cross-lane reduction happens once in XLA.
    def fold(v):
        return jnp.sum(v.reshape(rows // 8, 8, _LANES), axis=0)

    out_ref[0] = fold(ce)
    out_ref[1] = fold(inter)
    out_ref[2] = fold(union)


def _vmem_capacity_bytes():
    try:
        cap = getattr(pltpu.get_tpu_info(), "vmem_capacity_bytes", None)
        if cap:
            return int(cap)
    except Exception:
        pass
    return 64 * 1024 * 1024      # conservative default (v7x per-TensorCore VMEM)


def _pick_blocking(num_classes, hw, itemsize):
    """Pick (num_blocks, rows_per_block, vmem_limit): multi-MB steps, with the
    double-buffered inputs plus f32 temporaries budgeted to ~70% of VMEM."""
    rows_total = _cdiv(hw, _LANES)
    vmem = _vmem_capacity_bytes()
    budget = int(vmem * 0.7)
    # 3 tensors x 2 pipeline buffers of inputs + ~24 rows-worth of f32 temporaries.
    per_row = 3 * 2 * num_classes * _LANES * itemsize + 24 * _LANES * 4
    max_rows = max(8, min(2048, (budget // per_row) // 8 * 8))
    num_blocks = _cdiv(rows_total, max_rows)
    rows_per_block = _cdiv(_cdiv(rows_total, num_blocks), 8) * 8
    return num_blocks, rows_per_block, int(vmem * 0.9)


@jax.jit
def adaptive_weighted_loss(logits, logits1, logits2):
    """Forward pass of AdaptiveWeightedLoss. Accepts f32 or bf16 NCHW logits."""
    # TODO(synk): forward-only; no custom_vjp, so jax.grad does not reproduce the
    # CrossEntropy gradient w.r.t. `input` that training with the Torch module uses.
    N, C, H, W = logits.shape
    assert logits1.shape == (N, C, H, W) and logits2.shape == (N, C, H, W)
    HW = H * W
    itemsize = jnp.dtype(logits.dtype).itemsize

    num_blocks, rows_per_block, vmem_limit = _pick_blocking(C, HW, itemsize)
    rows_pad = num_blocks * rows_per_block
    hw_pad = rows_pad * _LANES
    block_pixels = rows_per_block * _LANES
    needs_mask = hw_pad != HW

    def prep(t):
        t = t.reshape(N, C, HW)                          # free view of NCHW
        if needs_mask:                                   # pad only when required
            t = jnp.pad(t, ((0, 0), (0, 0), (0, hw_pad - HW)))
        return t.reshape(N, C, rows_pad, _LANES)         # free view

    x, a, b = prep(logits), prep(logits1), prep(logits2)

    in_spec = pl.BlockSpec((None, C, rows_per_block, _LANES),
                           lambda n, i: (n, 0, i, 0))
    out_spec = pl.BlockSpec((None, None, 3, 8, _LANES),
                            lambda n, i: (n, i, 0, 0, 0))

    parts = pl.pallas_call(
        functools.partial(_adaptive_weighted_loss_kernel,
                          num_classes=C, hw=HW,
                          block_pixels=block_pixels, needs_mask=needs_mask),
        out_shape=jax.ShapeDtypeStruct((N, num_blocks, 3, 8, _LANES), jnp.float32),
        grid_spec=pltpu.PrefetchScalarGridSpec(
            num_scalar_prefetch=0,
            grid=(N, num_blocks),
            in_specs=[in_spec, in_spec, in_spec],
            out_specs=out_spec,
        ),
        compiler_params=pltpu.CompilerParams(
            # Every grid step writes its own output block -> both axes independent
            # (megacore can shard samples AND pixel blocks).
            dimension_semantics=("parallel", "parallel"),
            vmem_limit_bytes=vmem_limit,
        ),
    )(x, a, b)

    # Final tiny reductions + adaw weighting in XLA.
    sums = jnp.sum(parts, axis=(1, 3, 4))                # (N, 3)
    ce_sum, inter_sum, union_sum = sums[:, 0], sums[:, 1], sums[:, 2]
    adaw = inter_sum / (union_sum + 1e-6)
    per_sample_ce = ce_sum / jnp.float32(HW)
    return jnp.mean(adaw * per_sample_ce)


def _reference_loss(inp, inp1, inp2):
    """Pure-JAX mirror of AdaptiveWeightedLoss.forward."""
    s1 = jax.nn.softmax(inp1, axis=1)
    s2 = jax.nn.softmax(inp2, axis=1)
    pseudo = jnp.argmax(s1 + s2, axis=1)                 # (N, H, W)
    pred1 = jnp.argmax(s1, axis=1)
    pred2 = jnp.argmax(s2, axis=1)
    inter = (pred1 > 0) & (pred1 == pred2)
    union = (pred1 > 0) | (pred2 > 0)
    adaw = jnp.sum(inter, axis=(1, 2)).astype(jnp.float32) / (
        jnp.sum(union, axis=(1, 2)).astype(jnp.float32) + 1e-6)
    logp = jax.nn.log_softmax(inp, axis=1)
    picked = jnp.take_along_axis(logp, pseudo[:, None, :, :], axis=1)[:, 0]
    out = jnp.mean(-picked, axis=(1, 2))
    return jnp.mean(adaw * out)


if __name__ == "__main__":
    # Small segmentation-style shapes: batch=2, classes=4, spatial=16x16.
    N, C, H, W = 2, 4, 16, 16
    key = jax.random.PRNGKey(0)
    k0, k1, k2 = jax.random.split(key, 3)
    logits = jax.random.normal(k0, (N, C, H, W), dtype=jnp.float32)
    logits1 = jax.random.normal(k1, (N, C, H, W), dtype=jnp.float32)
    logits2 = jax.random.normal(k2, (N, C, H, W), dtype=jnp.float32)

    loss = adaptive_weighted_loss(logits, logits1, logits2)
    loss = jax.block_until_ready(loss)

    ref = _reference_loss(logits, logits1, logits2)
    assert jnp.allclose(loss, ref, rtol=1e-5, atol=1e-5), (loss, ref)

    print("KERNEL_OK")
</pallas_src>

<mosaic_0001>
module attributes {stable_mosaic.version = 11 : i64} {
  func.func @_adaptive_weighted_loss_kernel(%arg0: i32, %arg1: i32, %arg2: memref<1x4x8x128xf32, #tpu.memory_space<vmem>>, %arg3: memref<1x4x8x128xf32, #tpu.memory_space<vmem>>, %arg4: memref<1x4x8x128xf32, #tpu.memory_space<vmem>>, %arg5: memref<1x1x3x8x128xf32, #tpu.memory_space<vmem>>) attributes {dimension_semantics = [#tpu.dimension_semantics<parallel>, #tpu.dimension_semantics<parallel>], iteration_bounds = array<i64: 2, 1>, scalar_prefetch = 0 : i64, scratch_operands = 0 : i64, tpu.core_type = #tpu.core_type<tc>, window_params = [{transform_indices = @transform_0, window_bounds = array<i64: 1, 4, 8, 128>}, {transform_indices = @transform_1, window_bounds = array<i64: 1, 4, 8, 128>}, {transform_indices = @transform_2, window_bounds = array<i64: 1, 4, 8, 128>}, {transform_indices = @transform_3, window_bounds = array<i64: 1, 1, 3, 8, 128>}]} {
    %c0 = arith.constant 0 : index
    %c0_0 = arith.constant 0 : index
    %c0_1 = arith.constant 0 : index
    %c0_2 = arith.constant 0 : index
    %0 = vector.load %arg2[%c0, %c0_0, %c0_1, %c0_2] : memref<1x4x8x128xf32, #tpu.memory_space<vmem>>, vector<1x1x8x128xf32>
    %1 = vector.shape_cast %0 : vector<1x1x8x128xf32> to vector<8x128xf32>
    %c0_3 = arith.constant 0 : index
    %c0_4 = arith.constant 0 : index
    %c0_5 = arith.constant 0 : index
    %c0_6 = arith.constant 0 : index
    %2 = vector.load %arg3[%c0_3, %c0_4, %c0_5, %c0_6] : memref<1x4x8x128xf32, #tpu.memory_space<vmem>>, vector<1x1x8x128xf32>
    %3 = vector.shape_cast %2 : vector<1x1x8x128xf32> to vector<8x128xf32>
    %c0_7 = arith.constant 0 : index
    %c0_8 = arith.constant 0 : index
    %c0_9 = arith.constant 0 : index
    %c0_10 = arith.constant 0 : index
    %4 = vector.load %arg4[%c0_7, %c0_8, %c0_9, %c0_10] : memref<1x4x8x128xf32, #tpu.memory_space<vmem>>, vector<1x1x8x128xf32>
    %5 = vector.shape_cast %4 : vector<1x1x8x128xf32> to vector<8x128xf32>
    %c0_i32 = arith.constant 0 : i32
    %6 = vector.broadcast %c0_i32 : i32 to vector<8x128xi32>
    %c0_i32_11 = arith.constant 0 : i32
    %7 = vector.broadcast %c0_i32_11 : i32 to vector<8x128xi32>
    %c0_12 = arith.constant 0 : index
    %c1 = arith.constant 1 : index
    %c0_13 = arith.constant 0 : index
    %c0_14 = arith.constant 0 : index
    %8 = vector.load %arg2[%c0_12, %c1, %c0_13, %c0_14] : memref<1x4x8x128xf32, #tpu.memory_space<vmem>>, vector<1x1x8x128xf32>
    %9 = vector.shape_cast %8 : vector<1x1x8x128xf32> to vector<8x128xf32>
    %10 = arith.maximumf %1, %9 : vector<8x128xf32>
    %c0_15 = arith.constant 0 : index
    %c1_16 = arith.constant 1 : index
    %c0_17 = arith.constant 0 : index
    %c0_18 = arith.constant 0 : index
    %11 = vector.load %arg3[%c0_15, %c1_16, %c0_17, %c0_18] : memref<1x4x8x128xf32, #tpu.memory_space<vmem>>, vector<1x1x8x128xf32>
    %12 = vector.shape_cast %11 : vector<1x1x8x128xf32> to vector<8x128xf32>
    %13 = arith.cmpf ogt, %12, %3 : vector<8x128xf32>
    %14 = arith.select %13, %12, %3 : vector<8x128xi1>, vector<8x128xf32>
    %c1_i32 = arith.constant 1 : i32
    %15 = vector.broadcast %c1_i32 : i32 to vector<8x128xi32>
    %16 = arith.select %13, %15, %6 : vector<8x128xi1>, vector<8x128xi32>
    %c0_19 = arith.constant 0 : index
    %c1_20 = arith.constant 1 : index
    %c0_21 = arith.constant 0 : index
    %c0_22 = arith.constant 0 : index
    %17 = vector.load %arg4[%c0_19, %c1_20, %c0_21, %c0_22] : memref<1x4x8x128xf32, #tpu.memory_space<vmem>>, vector<1x1x8x128xf32>
    %18 = vector.shape_cast %17 : vector<1x1x8x128xf32> to vector<8x128xf32>
    %19 = arith.cmpf ogt, %18, %5 : vector<8x128xf32>
    %20 = arith.select %19, %18, %5 : vector<8x128xi1>, vector<8x128xf32>
    %c1_i32_23 = arith.constant 1 : i32
    %21 = vector.broadcast %c1_i32_23 : i32 to vector<8x128xi32>
    %22 = arith.select %19, %21, %7 : vector<8x128xi1>, vector<8x128xi32>
    %c0_24 = arith.constant 0 : index
    %c2 = arith.constant 2 : index
    %c0_25 = arith.constant 0 : index
    %c0_26 = arith.constant 0 : index
    %23 = vector.load %arg2[%c0_24, %c2, %c0_25, %c0_26] : memref<1x4x8x128xf32, #tpu.memory_space<vmem>>, vector<1x1x8x128xf32>
    %24 = vector.shape_cast %23 : vector<1x1x8x128xf32> to vector<8x128xf32>
    %25 = arith.maximumf %10, %24 : vector<8x128xf32>
    %c0_27 = arith.constant 0 : index
    %c2_28 = arith.constant 2 : index
    %c0_29 = arith.constant 0 : index
    %c0_30 = arith.constant 0 : index
    %26 = vector.load %arg3[%c0_27, %c2_28, %c0_29, %c0_30] : memref<1x4x8x128xf32, #tpu.memory_space<vmem>>, vector<1x1x8x128xf32>
    %27 = vector.shape_cast %26 : vector<1x1x8x128xf32> to vector<8x128xf32>
    %28 = arith.cmpf ogt, %27, %14 : vector<8x128xf32>
    %29 = arith.select %28, %27, %14 : vector<8x128xi1>, vector<8x128xf32>
    %c2_i32 = arith.constant 2 : i32
    %30 = vector.broadcast %c2_i32 : i32 to vector<8x128xi32>
    %31 = arith.select %28, %30, %16 : vector<8x128xi1>, vector<8x128xi32>
    %c0_31 = arith.constant 0 : index
    %c2_32 = arith.constant 2 : index
    %c0_33 = arith.constant 0 : index
    %c0_34 = arith.constant 0 : index
    %32 = vector.load %arg4[%c0_31, %c2_32, %c0_33, %c0_34] : memref<1x4x8x128xf32, #tpu.memory_space<vmem>>, vector<1x1x8x128xf32>
    %33 = vector.shape_cast %32 : vector<1x1x8x128xf32> to vector<8x128xf32>
    %34 = arith.cmpf ogt, %33, %20 : vector<8x128xf32>
    %35 = arith.select %34, %33, %20 : vector<8x128xi1>, vector<8x128xf32>
    %c2_i32_35 = arith.constant 2 : i32
    %36 = vector.broadcast %c2_i32_35 : i32 to vector<8x128xi32>
    %37 = arith.select %34, %36, %22 : vector<8x128xi1>, vector<8x128xi32>
    %c0_36 = arith.constant 0 : index
    %c3 = arith.constant 3 : index
    %c0_37 = arith.constant 0 : index
    %c0_38 = arith.constant 0 : index
    %38 = vector.load %arg2[%c0_36, %c3, %c0_37, %c0_38] : memref<1x4x8x128xf32, #tpu.memory_space<vmem>>, vector<1x1x8x128xf32>
    %39 = vector.shape_cast %38 : vector<1x1x8x128xf32> to vector<8x128xf32>
    %40 = arith.maximumf %25, %39 : vector<8x128xf32>
    %c0_39 = arith.constant 0 : index
    %c3_40 = arith.constant 3 : index
    %c0_41 = arith.constant 0 : index
    %c0_42 = arith.constant 0 : index
    %41 = vector.load %arg3[%c0_39, %c3_40, %c0_41, %c0_42] : memref<1x4x8x128xf32, #tpu.memory_space<vmem>>, vector<1x1x8x128xf32>
    %42 = vector.shape_cast %41 : vector<1x1x8x128xf32> to vector<8x128xf32>
    %43 = arith.cmpf ogt, %42, %29 : vector<8x128xf32>
    %44 = arith.select %43, %42, %29 : vector<8x128xi1>, vector<8x128xf32>
    %c3_i32 = arith.constant 3 : i32
    %45 = vector.broadcast %c3_i32 : i32 to vector<8x128xi32>
    %46 = arith.select %43, %45, %31 : vector<8x128xi1>, vector<8x128xi32>
    %c0_43 = arith.constant 0 : index
    %c3_44 = arith.constant 3 : index
    %c0_45 = arith.constant 0 : index
    %c0_46 = arith.constant 0 : index
    %47 = vector.load %arg4[%c0_43, %c3_44, %c0_45, %c0_46] : memref<1x4x8x128xf32, #tpu.memory_space<vmem>>, vector<1x1x8x128xf32>
    %48 = vector.shape_cast %47 : vector<1x1x8x128xf32> to vector<8x128xf32>
    %49 = arith.cmpf ogt, %48, %35 : vector<8x128xf32>
    %50 = arith.select %49, %48, %35 : vector<8x128xi1>, vector<8x128xf32>
    %c3_i32_47 = arith.constant 3 : i32
    %51 = vector.broadcast %c3_i32_47 : i32 to vector<8x128xi32>
    %52 = arith.select %49, %51, %37 : vector<8x128xi1>, vector<8x128xi32>
    %cst = arith.constant 0.000000e+00 : f32
    %53 = vector.broadcast %cst : f32 to vector<8x128xf32>
    %cst_48 = arith.constant 0.000000e+00 : f32
    %54 = vector.broadcast %cst_48 : f32 to vector<8x128xf32>
    %cst_49 = arith.constant 0.000000e+00 : f32
    %55 = vector.broadcast %cst_49 : f32 to vector<8x128xf32>
    %c0_50 = arith.constant 0 : index
    %c0_51 = arith.constant 0 : index
    %c0_52 = arith.constant 0 : index
    %c0_53 = arith.constant 0 : index
    %56 = vector.load %arg2[%c0_50, %c0_51, %c0_52, %c0_53] : memref<1x4x8x128xf32, #tpu.memory_space<vmem>>, vector<1x1x8x128xf32>
    %57 = vector.shape_cast %56 : vector<1x1x8x128xf32> to vector<8x128xf32>
    %58 = arith.subf %57, %40 : vector<8x128xf32>
    %59 = math.exp %58 : vector<8x128xf32>
    %60 = arith.addf %53, %59 : vector<8x128xf32>
    %c0_54 = arith.constant 0 : index
    %c0_55 = arith.constant 0 : index
    %c0_56 = arith.constant 0 : index
    %c0_57 = arith.constant 0 : index
    %61 = vector.load %arg3[%c0_54, %c0_55, %c0_56, %c0_57] : memref<1x4x8x128xf32, #tpu.memory_space<vmem>>, vector<1x1x8x128xf32>
    %62 = vector.shape_cast %61 : vector<1x1x8x128xf32> to vector<8x128xf32>
    %63 = arith.subf %62, %44 : vector<8x128xf32>
    %64 = math.exp %63 : vector<8x128xf32>
    %65 = arith.addf %54, %64 : vector<8x128xf32>
    %c0_58 = arith.constant 0 : index
    %c0_59 = arith.constant 0 : index
    %c0_60 = arith.constant 0 : index
    %c0_61 = arith.constant 0 : index
    %66 = vector.load %arg4[%c0_58, %c0_59, %c0_60, %c0_61] : memref<1x4x8x128xf32, #tpu.memory_space<vmem>>, vector<1x1x8x128xf32>
    %67 = vector.shape_cast %66 : vector<1x1x8x128xf32> to vector<8x128xf32>
    %68 = arith.subf %67, %50 : vector<8x128xf32>
    %69 = math.exp %68 : vector<8x128xf32>
    %70 = arith.addf %55, %69 : vector<8x128xf32>
    %c0_62 = arith.constant 0 : index
    %c1_63 = arith.constant 1 : index
    %c0_64 = arith.constant 0 : index
    %c0_65 = arith.constant 0 : index
    %71 = vector.load %arg2[%c0_62, %c1_63, %c0_64, %c0_65] : memref<1x4x8x128xf32, #tpu.memory_space<vmem>>, vector<1x1x8x128xf32>
    %72 = vector.shape_cast %71 : vector<1x1x8x128xf32> to vector<8x128xf32>
    %73 = arith.subf %72, %40 : vector<8x128xf32>
    %74 = math.exp %73 : vector<8x128xf32>
    %75 = arith.addf %60, %74 : vector<8x128xf32>
    %c0_66 = arith.constant 0 : index
    %c1_67 = arith.constant 1 : index
    %c0_68 = arith.constant 0 : index
    %c0_69 = arith.constant 0 : index
    %76 = vector.load %arg3[%c0_66, %c1_67, %c0_68, %c0_69] : memref<1x4x8x128xf32, #tpu.memory_space<vmem>>, vector<1x1x8x128xf32>
    %77 = vector.shape_cast %76 : vector<1x1x8x128xf32> to vector<8x128xf32>
    %78 = arith.subf %77, %44 : vector<8x128xf32>
    %79 = math.exp %78 : vector<8x128xf32>
    %80 = arith.addf %65, %79 : vector<8x128xf32>
    %c0_70 = arith.constant 0 : index
    %c1_71 = arith.constant 1 : index
    %c0_72 = arith.constant 0 : index
    %c0_73 = arith.constant 0 : index
    %81 = vector.load %arg4[%c0_70, %c1_71, %c0_72, %c0_73] : memref<1x4x8x128xf32, #tpu.memory_space<vmem>>, vector<1x1x8x128xf32>
    %82 = vector.shape_cast %81 : vector<1x1x8x128xf32> to vector<8x128xf32>
    %83 = arith.subf %82, %50 : vector<8x128xf32>
    %84 = math.exp %83 : vector<8x128xf32>
    %85 = arith.addf %70, %84 : vector<8x128xf32>
    %c0_74 = arith.constant 0 : index
    %c2_75 = arith.constant 2 : index
    %c0_76 = arith.constant 0 : index
    %c0_77 = arith.constant 0 : index
    %86 = vector.load %arg2[%c0_74, %c2_75, %c0_76, %c0_77] : memref<1x4x8x128xf32, #tpu.memory_space<vmem>>, vector<1x1x8x128xf32>
    %87 = vector.shape_cast %86 : vector<1x1x8x128xf32> to vector<8x128xf32>
    %88 = arith.subf %87, %40 : vector<8x128xf32>
    %89 = math.exp %88 : vector<8x128xf32>
    %90 = arith.addf %75, %89 : vector<8x128xf32>
    %c0_78 = arith.constant 0 : index
    %c2_79 = arith.constant 2 : index
    %c0_80 = arith.constant 0 : index
    %c0_81 = arith.constant 0 : index
    %91 = vector.load %arg3[%c0_78, %c2_79, %c0_80, %c0_81] : memref<1x4x8x128xf32, #tpu.memory_space<vmem>>, vector<1x1x8x128xf32>
    %92 = vector.shape_cast %91 : vector<1x1x8x128xf32> to vector<8x128xf32>
    %93 = arith.subf %92, %44 : vector<8x128xf32>
    %94 = math.exp %93 : vector<8x128xf32>
    %95 = arith.addf %80, %94 : vector<8x128xf32>
    %c0_82 = arith.constant 0 : index
    %c2_83 = arith.constant 2 : index
    %c0_84 = arith.constant 0 : index
    %c0_85 = arith.constant 0 : index
    %96 = vector.load %arg4[%c0_82, %c2_83, %c0_84, %c0_85] : memref<1x4x8x128xf32, #tpu.memory_space<vmem>>, vector<1x1x8x128xf32>
    %97 = vector.shape_cast %96 : vector<1x1x8x128xf32> to vector<8x128xf32>
    %98 = arith.subf %97, %50 : vector<8x128xf32>
    %99 = math.exp %98 : vector<8x128xf32>
    %100 = arith.addf %85, %99 : vector<8x128xf32>
    %c0_86 = arith.constant 0 : index
    %c3_87 = arith.constant 3 : index
    %c0_88 = arith.constant 0 : index
    %c0_89 = arith.constant 0 : index
    %101 = vector.load %arg2[%c0_86, %c3_87, %c0_88, %c0_89] : memref<1x4x8x128xf32, #tpu.memory_space<vmem>>, vector<1x1x8x128xf32>
    %102 = vector.shape_cast %101 : vector<1x1x8x128xf32> to vector<8x128xf32>
    %103 = arith.subf %102, %40 : vector<8x128xf32>
    %104 = math.exp %103 : vector<8x128xf32>
    %105 = arith.addf %90, %104 : vector<8x128xf32>
    %c0_90 = arith.constant 0 : index
    %c3_91 = arith.constant 3 : index
    %c0_92 = arith.constant 0 : index
    %c0_93 = arith.constant 0 : index
    %106 = vector.load %arg3[%c0_90, %c3_91, %c0_92, %c0_93] : memref<1x4x8x128xf32, #tpu.memory_space<vmem>>, vector<1x1x8x128xf32>
    %107 = vector.shape_cast %106 : vector<1x1x8x128xf32> to vector<8x128xf32>
    %108 = arith.subf %107, %44 : vector<8x128xf32>
    %109 = math.exp %108 : vector<8x128xf32>
    %110 = arith.addf %95, %109 : vector<8x128xf32>
    %c0_94 = arith.constant 0 : index
    %c3_95 = arith.constant 3 : index
    %c0_96 = arith.constant 0 : index
    %c0_97 = arith.constant 0 : index
    %111 = vector.load %arg4[%c0_94, %c3_95, %c0_96, %c0_97] : memref<1x4x8x128xf32, #tpu.memory_space<vmem>>, vector<1x1x8x128xf32>
    %112 = vector.shape_cast %111 : vector<1x1x8x128xf32> to vector<8x128xf32>
    %113 = arith.subf %112, %50 : vector<8x128xf32>
    %114 = math.exp %113 : vector<8x128xf32>
    %115 = arith.addf %100, %114 : vector<8x128xf32>
    %cst_98 = arith.constant 1.000000e+00 : f32
    %116 = vector.broadcast %cst_98 : f32 to vector<8x128xf32>
    %117 = arith.divf %116, %110 : vector<8x128xf32>
    %cst_99 = arith.constant 1.000000e+00 : f32
    %118 = vector.broadcast %cst_99 : f32 to vector<8x128xf32>
    %119 = arith.divf %118, %115 : vector<8x128xf32>
    %120 = math.log %105 : vector<8x128xf32>
    %121 = arith.addf %40, %120 : vector<8x128xf32>
    %c0_100 = arith.constant 0 : index
    %c0_101 = arith.constant 0 : index
    %c0_102 = arith.constant 0 : index
    %c0_103 = arith.constant 0 : index
    %122 = vector.load %arg3[%c0_100, %c0_101, %c0_102, %c0_103] : memref<1x4x8x128xf32, #tpu.memory_space<vmem>>, vector<1x1x8x128xf32>
    %123 = vector.shape_cast %122 : vector<1x1x8x128xf32> to vector<8x128xf32>
    %124 = arith.subf %123, %44 : vector<8x128xf32>
    %125 = math.exp %124 : vector<8x128xf32>
    %126 = arith.mulf %125, %117 : vector<8x128xf32>
    %c0_104 = arith.constant 0 : index
    %c0_105 = arith.constant 0 : index
    %c0_106 = arith.constant 0 : index
    %c0_107 = arith.constant 0 : index
    %127 = vector.load %arg4[%c0_104, %c0_105, %c0_106, %c0_107] : memref<1x4x8x128xf32, #tpu.memory_space<vmem>>, vector<1x1x8x128xf32>
    %128 = vector.shape_cast %127 : vector<1x1x8x128xf32> to vector<8x128xf32>
    %129 = arith.subf %128, %50 : vector<8x128xf32>
    %130 = math.exp %129 : vector<8x128xf32>
    %131 = arith.mulf %130, %119 : vector<8x128xf32>
    %132 = arith.addf %126, %131 : vector<8x128xf32>
    %c0_108 = arith.constant 0 : index
    %c0_109 = arith.constant 0 : index
    %c0_110 = arith.constant 0 : index
    %c0_111 = arith.constant 0 : index
    %133 = vector.load %arg2[%c0_108, %c0_109, %c0_110, %c0_111] : memref<1x4x8x128xf32, #tpu.memory_space<vmem>>, vector<1x1x8x128xf32>
    %134 = vector.shape_cast %133 : vector<1x1x8x128xf32> to vector<8x128xf32>
    %c0_112 = arith.constant 0 : index
    %c1_113 = arith.constant 1 : index
    %c0_114 = arith.constant 0 : index
    %c0_115 = arith.constant 0 : index
    %135 = vector.load %arg3[%c0_112, %c1_113, %c0_114, %c0_115] : memref<1x4x8x128xf32, #tpu.memory_space<vmem>>, vector<1x1x8x128xf32>
    %136 = vector.shape_cast %135 : vector<1x1x8x128xf32> to vector<8x128xf32>
    %137 = arith.subf %136, %44 : vector<8x128xf32>
    %138 = math.exp %137 : vector<8x128xf32>
    %139 = arith.mulf %138, %117 : vector<8x128xf32>
    %c0_116 = arith.constant 0 : index
    %c1_117 = arith.constant 1 : index
    %c0_118 = arith.constant 0 : index
    %c0_119 = arith.constant 0 : index
    %140 = vector.load %arg4[%c0_116, %c1_117, %c0_118, %c0_119] : memref<1x4x8x128xf32, #tpu.memory_space<vmem>>, vector<1x1x8x128xf32>
    %141 = vector.shape_cast %140 : vector<1x1x8x128xf32> to vector<8x128xf32>
    %142 = arith.subf %141, %50 : vector<8x128xf32>
    %143 = math.exp %142 : vector<8x128xf32>
    %144 = arith.mulf %143, %119 : vector<8x128xf32>
    %145 = arith.addf %139, %144 : vector<8x128xf32>
    %146 = arith.cmpf ogt, %145, %132 : vector<8x128xf32>
    %147 = arith.select %146, %145, %132 : vector<8x128xi1>, vector<8x128xf32>
    %c0_120 = arith.constant 0 : index
    %c1_121 = arith.constant 1 : index
    %c0_122 = arith.constant 0 : index
    %c0_123 = arith.constant 0 : index
    %148 = vector.load %arg2[%c0_120, %c1_121, %c0_122, %c0_123] : memref<1x4x8x128xf32, #tpu.memory_space<vmem>>, vector<1x1x8x128xf32>
    %149 = vector.shape_cast %148 : vector<1x1x8x128xf32> to vector<8x128xf32>
    %150 = arith.select %146, %149, %134 : vector<8x128xi1>, vector<8x128xf32>
    %c0_124 = arith.constant 0 : index
    %c2_125 = arith.constant 2 : index
    %c0_126 = arith.constant 0 : index
    %c0_127 = arith.constant 0 : index
    %151 = vector.load %arg3[%c0_124, %c2_125, %c0_126, %c0_127] : memref<1x4x8x128xf32, #tpu.memory_space<vmem>>, vector<1x1x8x128xf32>
    %152 = vector.shape_cast %151 : vector<1x1x8x128xf32> to vector<8x128xf32>
    %153 = arith.subf %152, %44 : vector<8x128xf32>
    %154 = math.exp %153 : vector<8x128xf32>
    %155 = arith.mulf %154, %117 : vector<8x128xf32>
    %c0_128 = arith.constant 0 : index
    %c2_129 = arith.constant 2 : index
    %c0_130 = arith.constant 0 : index
    %c0_131 = arith.constant 0 : index
    %156 = vector.load %arg4[%c0_128, %c2_129, %c0_130, %c0_131] : memref<1x4x8x128xf32, #tpu.memory_space<vmem>>, vector<1x1x8x128xf32>
    %157 = vector.shape_cast %156 : vector<1x1x8x128xf32> to vector<8x128xf32>
    %158 = arith.subf %157, %50 : vector<8x128xf32>
    %159 = math.exp %158 : vector<8x128xf32>
    %160 = arith.mulf %159, %119 : vector<8x128xf32>
    %161 = arith.addf %155, %160 : vector<8x128xf32>
    %162 = arith.cmpf ogt, %161, %147 : vector<8x128xf32>
    %163 = arith.select %162, %161, %147 : vector<8x128xi1>, vector<8x128xf32>
    %c0_132 = arith.constant 0 : index
    %c2_133 = arith.constant 2 : index
    %c0_134 = arith.constant 0 : index
    %c0_135 = arith.constant 0 : index
    %164 = vector.load %arg2[%c0_132, %c2_133, %c0_134, %c0_135] : memref<1x4x8x128xf32, #tpu.memory_space<vmem>>, vector<1x1x8x128xf32>
    %165 = vector.shape_cast %164 : vector<1x1x8x128xf32> to vector<8x128xf32>
    %166 = arith.select %162, %165, %150 : vector<8x128xi1>, vector<8x128xf32>
    %c0_136 = arith.constant 0 : index
    %c3_137 = arith.constant 3 : index
    %c0_138 = arith.constant 0 : index
    %c0_139 = arith.constant 0 : index
    %167 = vector.load %arg3[%c0_136, %c3_137, %c0_138, %c0_139] : memref<1x4x8x128xf32, #tpu.memory_space<vmem>>, vector<1x1x8x128xf32>
    %168 = vector.shape_cast %167 : vector<1x1x8x128xf32> to vector<8x128xf32>
    %169 = arith.subf %168, %44 : vector<8x128xf32>
    %170 = math.exp %169 : vector<8x128xf32>
    %171 = arith.mulf %170, %117 : vector<8x128xf32>
    %c0_140 = arith.constant 0 : index
    %c3_141 = arith.constant 3 : index
    %c0_142 = arith.constant 0 : index
    %c0_143 = arith.constant 0 : index
    %172 = vector.load %arg4[%c0_140, %c3_141, %c0_142, %c0_143] : memref<1x4x8x128xf32, #tpu.memory_space<vmem>>, vector<1x1x8x128xf32>
    %173 = vector.shape_cast %172 : vector<1x1x8x128xf32> to vector<8x128xf32>
    %174 = arith.subf %173, %50 : vector<8x128xf32>
    %175 = math.exp %174 : vector<8x128xf32>
    %176 = arith.mulf %175, %119 : vector<8x128xf32>
    %177 = arith.addf %171, %176 : vector<8x128xf32>
    %178 = arith.cmpf ogt, %177, %163 : vector<8x128xf32>
    %c0_144 = arith.constant 0 : index
    %c3_145 = arith.constant 3 : index
    %c0_146 = arith.constant 0 : index
    %c0_147 = arith.constant 0 : index
    %179 = vector.load %arg2[%c0_144, %c3_145, %c0_146, %c0_147] : memref<1x4x8x128xf32, #tpu.memory_space<vmem>>, vector<1x1x8x128xf32>
    %180 = vector.shape_cast %179 : vector<1x1x8x128xf32> to vector<8x128xf32>
    %181 = arith.select %178, %180, %166 : vector<8x128xi1>, vector<8x128xf32>
    %182 = arith.subf %121, %181 : vector<8x128xf32>
    %c0_i32_148 = arith.constant 0 : i32
    %183 = vector.broadcast %c0_i32_148 : i32 to vector<8x128xi32>
    %184 = arith.cmpi sgt, %46, %183 : vector<8x128xi32>
    %185 = arith.cmpi eq, %46, %52 : vector<8x128xi32>
    %186 = arith.andi %184, %185 : vector<8x128xi1>
    %187 = arith.extui %186 : vector<8x128xi1> to vector<8x128xi32>
    %188 = arith.sitofp %187 : vector<8x128xi32> to vector<8x128xf32>
    %c0_i32_149 = arith.constant 0 : i32
    %189 = vector.broadcast %c0_i32_149 : i32 to vector<8x128xi32>
    %190 = arith.cmpi sgt, %46, %189 : vector<8x128xi32>
    %c0_i32_150 = arith.constant 0 : i32
    %191 = vector.broadcast %c0_i32_150 : i32 to vector<8x128xi32>
    %192 = arith.cmpi sgt, %52, %191 : vector<8x128xi32>
    %193 = arith.ori %190, %192 : vector<8x128xi1>
    %194 = arith.extui %193 : vector<8x128xi1> to vector<8x128xi32>
    %195 = arith.sitofp %194 : vector<8x128xi32> to vector<8x128xf32>
    %196 = tpu.iota {dimensions = array<i32: 0>} : vector<8x128xi32>
    %197 = tpu.iota {dimensions = array<i32: 1>} : vector<8x128xi32>
    %c1024_i32 = arith.constant 1024 : i32
    %198 = arith.muli %arg1, %c1024_i32 : i32
    %c128_i32 = arith.constant 128 : i32
    %199 = vector.broadcast %c128_i32 : i32 to vector<8x128xi32>
    %200 = arith.muli %196, %199 : vector<8x128xi32>
    %201 = vector.broadcast %198 : i32 to vector<8x128xi32>
    %202 = arith.addi %201, %200 : vector<8x128xi32>
    %203 = arith.addi %202, %197 : vector<8x128xi32>
    %c256_i32 = arith.constant 256 : i32
    %204 = vector.broadcast %c256_i32 : i32 to vector<8x128xi32>
    %205 = arith.cmpi slt, %203, %204 : vector<8x128xi32>
    %206 = arith.extui %205 : vector<8x128xi1> to vector<8x128xi32>
    %207 = arith.sitofp %206 : vector<8x128xi32> to vector<8x128xf32>
    %208 = arith.mulf %182, %207 : vector<8x128xf32>
    %209 = arith.mulf %188, %207 : vector<8x128xf32>
    %210 = arith.mulf %195, %207 : vector<8x128xf32>
    %211 = vector.shape_cast %208 : vector<8x128xf32> to vector<1x8x128xf32>
    %cst_151 = arith.constant dense<0.000000e+00> : vector<8x128xf32>
    %212 = vector.multi_reduction <add>, %211, %cst_151 [0] : vector<1x8x128xf32> to vector<8x128xf32>
    %c0_152 = arith.constant 0 : index
    %c0_153 = arith.constant 0 : index
    %c0_154 = arith.constant 0 : index
    %c0_155 = arith.constant 0 : index
    %c0_156 = arith.constant 0 : index
    %213 = vector.load %arg5[%c0_152, %c0_153, %c0_154, %c0_155, %c0_156] : memref<1x1x3x8x128xf32, #tpu.memory_space<vmem>>, vector<1x1x1x8x128xf32>
    %214 = vector.shape_cast %213 : vector<1x1x1x8x128xf32> to vector<8x128xf32>
    %215 = vector.shape_cast %212 : vector<8x128xf32> to vector<1x1x1x8x128xf32>
    tpu.vector_store %arg5[%c0_152, %c0_153, %c0_154, %c0_155, %c0_156], %215 {strides = array<i32>} : memref<1x1x3x8x128xf32, #tpu.memory_space<vmem>>, vector<1x1x1x8x128xf32>,
    %216 = vector.shape_cast %209 : vector<8x128xf32> to vector<1x8x128xf32>
    %cst_157 = arith.constant dense<0.000000e+00> : vector<8x128xf32>
    %217 = vector.multi_reduction <add>, %216, %cst_157 [0] : vector<1x8x128xf32> to vector<8x128xf32>
    %c0_158 = arith.constant 0 : index
    %c0_159 = arith.constant 0 : index
    %c1_160 = arith.constant 1 : index
    %c0_161 = arith.constant 0 : index
    %c0_162 = arith.constant 0 : index
    %218 = vector.load %arg5[%c0_158, %c0_159, %c1_160, %c0_161, %c0_162] : memref<1x1x3x8x128xf32, #tpu.memory_space<vmem>>, vector<1x1x1x8x128xf32>
    %219 = vector.shape_cast %218 : vector<1x1x1x8x128xf32> to vector<8x128xf32>
    %220 = vector.shape_cast %217 : vector<8x128xf32> to vector<1x1x1x8x128xf32>
    tpu.vector_store %arg5[%c0_158, %c0_159, %c1_160, %c0_161, %c0_162], %220 {strides = array<i32>} : memref<1x1x3x8x128xf32, #tpu.memory_space<vmem>>, vector<1x1x1x8x128xf32>,
    %221 = vector.shape_cast %210 : vector<8x128xf32> to vector<1x8x128xf32>
    %cst_163 = arith.constant dense<0.000000e+00> : vector<8x128xf32>
    %222 = vector.multi_reduction <add>, %221, %cst_163 [0] : vector<1x8x128xf32> to vector<8x128xf32>
    %c0_164 = arith.constant 0 : index
    %c0_165 = arith.constant 0 : index
    %c2_166 = arith.constant 2 : index
    %c0_167 = arith.constant 0 : index
    %c0_168 = arith.constant 0 : index
    %223 = vector.load %arg5[%c0_164, %c0_165, %c2_166, %c0_167, %c0_168] : memref<1x1x3x8x128xf32, #tpu.memory_space<vmem>>, vector<1x1x1x8x128xf32>
    %224 = vector.shape_cast %223 : vector<1x1x1x8x128xf32> to vector<8x128xf32>
    %225 = vector.shape_cast %222 : vector<8x128xf32> to vector<1x1x1x8x128xf32>
    tpu.vector_store %arg5[%c0_164, %c0_165, %c2_166, %c0_167, %c0_168], %225 {strides = array<i32>} : memref<1x1x3x8x128xf32, #tpu.memory_space<vmem>>, vector<1x1x1x8x128xf32>,
    return
  }
  func.func @transform_0(%arg0: i32, %arg1: i32) -> (i32, i32, i32, i32) {
    %c0_i32 = arith.constant 0 : i32
    %c0_i32_0 = arith.constant 0 : i32
    %c0_i32_1 = arith.constant 0 : i32
    return %arg0, %c0_i32, %arg1, %c0_i32_0 : i32, i32, i32, i32
  }
  func.func @transform_1(%arg0: i32, %arg1: i32) -> (i32, i32, i32, i32) {
    %c0_i32 = arith.constant 0 : i32
    %c0_i32_0 = arith.constant 0 : i32
    %c0_i32_1 = arith.constant 0 : i32
    return %arg0, %c0_i32, %arg1, %c0_i32_0 : i32, i32, i32, i32
  }
  func.func @transform_2(%arg0: i32, %arg1: i32) -> (i32, i32, i32, i32) {
    %c0_i32 = arith.constant 0 : i32
    %c0_i32_0 = arith.constant 0 : i32
    %c0_i32_1 = arith.constant 0 : i32
    return %arg0, %c0_i32, %arg1, %c0_i32_0 : i32, i32, i32, i32
  }
  func.func @transform_3(%arg0: i32, %arg1: i32) -> (i32, i32, i32, i32, i32) {
    %c0_i32 = arith.constant 0 : i32
    %c0_i32_0 = arith.constant 0 : i32
    %c0_i32_1 = arith.constant 0 : i32
    %c0_i32_2 = arith.constant 0 : i32
    return %arg0, %arg1, %c0_i32, %c0_i32_0, %c0_i32_1 : i32, i32, i32, i32, i32
  }
}

</mosaic_0001>

<llo_original>
// kernel: adaptive_weighted_loss.1
$region0: #{adaptive_weighted_loss.1}
  #allocation0 [shape = 'u32[]', space=smem, size = 0x4, offset = 0x4, fixed_abs, tag = 'smem constant byte address 0x4 - core index']
  #allocation1 [shape = 'u32[144,128]{1,0:T(1,128)}', space=vmem, size = 0x12000, scoped, tag = 'internal scratch']
  %s0 = inlined_call_operand.vmem [shape: f32[2,4,8,128], index: 0, kind: input, shape index: {}]
  %s1 = inlined_call_operand.vmem [shape: f32[2,4,8,128], index: 1, kind: input, shape index: {}]
  %s2 = inlined_call_operand.vmem [shape: f32[2,4,8,128], index: 2, kind: input, shape index: {}]
  %s3 = inlined_call_operand.vmem [shape: f32[2,1,3,8,128], index: 3, kind: output, shape index: {}]
  %s4 = sld [smem:[#allocation0]]
  $region45: #{adaptive_weighted_loss.1} parent=0
    _
  %s6 = ssub.s32 1, %s4
  %s7 = scalar_select 0, %s6, %s4
  loop: start=0, step=1, limit=4
  $region2: #{adaptive_weighted_loss.1} parent=0 // loop_pre_header
    _
  $region3: #{adaptive_weighted_loss.1} parent=0 // loop_header
    %s9 = sphi 0, %s13
    %p10 = scmp.ge.s32.totalorder %s9, 4
    %s16 = sphi 0, %s28
    %s17 = sphi 0, %s24
    %s18 = sphi 0, %s16
    %s19 = sphi 0, %s17
    %s20 = sphi 0, %s18
    %s21 = sphi 0, %s19
    %s33 = sphi 0, %s35
    %s36 = sphi 0, %s33
    %s37 = sphi 0, %s36
    %s53 = sphi 0, %s37
    %s61 = sphi 0, %s63
    %s64 = sphi 0, %s61
    %s65 = sphi 0, %s64
    %s81 = sphi 0, %s65
    %s89 = sphi 0, %s91
    %s92 = sphi 0, %s89
    %s93 = sphi 0, %s92
    %s109 = sphi 0, %s93
    %s117 = sphi 0, %s119
    %s120 = sphi 0, %s117
    %s121 = sphi 0, %s120
    %s137 = sphi 0, %s121
  $region4: #{adaptive_weighted_loss.1} parent=0 // loop_header_branch
    %12 = sbr.rel (%p10) target = $region8
  $region5: #{adaptive_weighted_loss.1} parent=0 // loop_body
    %s14 = ssub.s32 %s9, 1
    %s15 = ssub.s32 %s9, 2
    %s22 = sadd.s32 1, %s17
    %p23 = scmp.ge.s32.totalorder %s22, 1
    %s24 = scalar_select %p23, 0, %s22
    %s25 = sadd.s32 1, %s16
    %s26 = scalar_select %p23, %s25, %s16
    %p27 = scmp.ge.s32.totalorder %s26, 2
    %s28 = scalar_select %p27, 0, %s26
    %s29 = ssub.s32 %s16, %s28
    %s30 = ssub.s32 %s17, %s24
    %s31 = sor.u32 %s29, %s30
    %p32 = scmp.eq.s32.totalorder %s31, 0
    %s34 = sadd.s32 %s33, 1
    %s35 = scalar_select %p32, %s33, %s34
    %p38 = pneg %p32
    %p39 = scmp.eq.s32.totalorder %s9, 1
    %p40 = por %p38, %p39
    %p41 = scmp.ne.s32.totalorder %s33, %s36
    %p42 = scmp.eq.s32.totalorder %s9, 0
    %p43 = por %p41, %p42
    %p44 = scmp.ne.s32.totalorder %s33, %s36
    %p45 = scmp.eq.s32.totalorder %s14, 1
    %p46 = por %p44, %p45
    %p47 = scmp.ne.s32.totalorder %s36, %s37
    %p48 = scmp.eq.s32.totalorder %s14, 0
    %p49 = por %p47, %p48
    %p50 = scmp.ne.s32.totalorder %s36, %s37
    %p51 = scmp.eq.s32.totalorder %s15, 1
    %p52 = por %p50, %p51
    %p54 = scmp.ne.s32.totalorder %s37, %s53
    %p55 = scmp.eq.s32.totalorder %s15, 0
    %p56 = por %p54, %p55
    %s57 = ssub.s32 %s16, %s28
    %s58 = ssub.s32 %s17, %s24
    %s59 = sor.u32 %s57, %s58
    %p60 = scmp.eq.s32.totalorder %s59, 0
    %s62 = sadd.s32 %s61, 1
    %s63 = scalar_select %p60, %s61, %s62
    %p66 = pneg %p60
    %p67 = scmp.eq.s32.totalorder %s9, 1
    %p68 = por %p66, %p67
    %p69 = scmp.ne.s32.totalorder %s61, %s64
    %p70 = scmp.eq.s32.totalorder %s9, 0
    %p71 = por %p69, %p70
    %p72 = scmp.ne.s32.totalorder %s61, %s64
    %p73 = scmp.eq.s32.totalorder %s14, 1
    %p74 = por %p72, %p73
    %p75 = scmp.ne.s32.totalorder %s64, %s65
    %p76 = scmp.eq.s32.totalorder %s14, 0
    %p77 = por %p75, %p76
    %p78 = scmp.ne.s32.totalorder %s64, %s65
    %p79 = scmp.eq.s32.totalorder %s15, 1
    %p80 = por %p78, %p79
    %p82 = scmp.ne.s32.totalorder %s65, %s81
    %p83 = scmp.eq.s32.totalorder %s15, 0
    %p84 = por %p82, %p83
    %s85 = ssub.s32 %s16, %s28
    %s86 = ssub.s32 %s17, %s24
    %s87 = sor.u32 %s85, %s86
    %p88 = scmp.eq.s32.totalorder %s87, 0
    %s90 = sadd.s32 %s89, 1
    %s91 = scalar_select %p88, %s89, %s90
    %p94 = pneg %p88
    %p95 = scmp.eq.s32.totalorder %s9, 1
    %p96 = por %p94, %p95
    %p97 = scmp.ne.s32.totalorder %s89, %s92
    %p98 = scmp.eq.s32.totalorder %s9, 0
    %p99 = por %p97, %p98
    %p100 = scmp.ne.s32.totalorder %s89, %s92
    %p101 = scmp.eq.s32.totalorder %s14, 1
    %p102 = por %p100, %p101
    %p103 = scmp.ne.s32.totalorder %s92, %s93
    %p104 = scmp.eq.s32.totalorder %s14, 0
    %p105 = por %p103, %p104
    %p106 = scmp.ne.s32.totalorder %s92, %s93
    %p107 = scmp.eq.s32.totalorder %s15, 1
    %p108 = por %p106, %p107
    %p110 = scmp.ne.s32.totalorder %s93, %s109
    %p111 = scmp.eq.s32.totalorder %s15, 0
    %p112 = por %p110, %p111
    %s113 = ssub.s32 %s16, %s28
    %s114 = ssub.s32 %s17, %s24
    %s115 = sor.u32 %s113, %s114
    %p116 = scmp.eq.s32.totalorder %s115, 0
    %s118 = sadd.s32 %s117, 1
    %s119 = scalar_select %p116, %s117, %s118
    %p122 = pneg %p116
    %p123 = scmp.eq.s32.totalorder %s9, 1
    %p124 = por %p122, %p123
    %p125 = scmp.ne.s32.totalorder %s117, %s120
    %p126 = scmp.eq.s32.totalorder %s9, 0
    %p127 = por %p125, %p126
    %p128 = scmp.ne.s32.totalorder %s117, %s120
    %p129 = scmp.eq.s32.totalorder %s14, 1
    %p130 = por %p128, %p129
    %p131 = scmp.ne.s32.totalorder %s120, %s121
    %p132 = scmp.eq.s32.totalorder %s14, 0
    %p133 = por %p131, %p132
    %p134 = scmp.ne.s32.totalorder %s120, %s121
    %p135 = scmp.eq.s32.totalorder %s15, 1
    %p136 = por %p134, %p135
    %p138 = scmp.ne.s32.totalorder %s121, %s137
    %p139 = scmp.eq.s32.totalorder %s15, 0
    %p140 = por %p138, %p139
    %p141 = scmp.le.s32.totalorder 1, %s9
    %p142 = scmp.lt.s32.totalorder %s9, 3
    %p143 = pnand %p141, %p142
    %p144 = pneg %p143
    // Predicated region
    $region9: #{adaptive_weighted_loss.1} parent=5 // pred_check
      _
    $region10: #{adaptive_weighted_loss.1} parent=5 // pred_check_branch
      %146 = sbr.rel (%p143) target = $region12
    $region11: #{adaptive_weighted_loss.1} parent=5 // pred_region
      %s147 = ssub.s32 %s9, 1
    $region12: #{adaptive_weighted_loss.1} parent=5 // pred_fallthru
      _
    %p148 = scmp.lt.s32.totalorder %s9, 2
    // Predicated region
    $region13: #{adaptive_weighted_loss.1} parent=5 // pred_check
      %p149 = pneg %p148
    $region14: #{adaptive_weighted_loss.1} parent=5 // pred_check_branch
      %151 = sbr.rel (%p149) target = $region16
    $region15: #{adaptive_weighted_loss.1} parent=5 // pred_region
      // Predicated region
      $region17: #{adaptive_weighted_loss.1} parent=15 // pred_check
        %p152 = pneg %p43
      $region18: #{adaptive_weighted_loss.1} parent=15 // pred_check_branch
        %154 = sbr.rel (%p152) target = $region20
      $region19: #{adaptive_weighted_loss.1} parent=15 // pred_region
        %p155 = scmp.lt.s32.totalorder %s16, 1
        %s156 = scalar_select %p155, %s16, 1
        %p157 = scmp.lt.s32.totalorder %s17, 0
        %s158 = scalar_select %p157, %s17, 0
        %s159 = smul.addr %s156, 4
        %s160 = sadd.s32 %s158, %s159
        %s161 = smul.addr %s160, 8
        %s162 = scalar_lea.vmem %s0, %s161
      $region20: #{adaptive_weighted_loss.1} parent=15 // pred_fallthru
        _
      // Predicated region
      $region21: #{adaptive_weighted_loss.1} parent=15 // pred_check
        %p163 = pneg %p71
      $region22: #{adaptive_weighted_loss.1} parent=15 // pred_check_branch
        %165 = sbr.rel (%p163) target = $region24
      $region23: #{adaptive_weighted_loss.1} parent=15 // pred_region
        %p166 = scmp.lt.s32.totalorder %s16, 1
        %s167 = scalar_select %p166, %s16, 1
        %p168 = scmp.lt.s32.totalorder %s17, 0
        %s169 = scalar_select %p168, %s17, 0
        %s170 = smul.addr %s167, 4
        %s171 = sadd.s32 %s169, %s170
        %s172 = smul.addr %s171, 8
        %s173 = scalar_lea.vmem %s1, %s172
      $region24: #{adaptive_weighted_loss.1} parent=15 // pred_fallthru
        _
      // Predicated region
      $region25: #{adaptive_weighted_loss.1} parent=15 // pred_check
        %p174 = pneg %p99
      $region26: #{adaptive_weighted_loss.1} parent=15 // pred_check_branch
        %176 = sbr.rel (%p174) target = $region28
      $region27: #{adaptive_weighted_loss.1} parent=15 // pred_region
        %p177 = scmp.lt.s32.totalorder %s16, 1
        %s178 = scalar_select %p177, %s16, 1
        %p179 = scmp.lt.s32.totalorder %s17, 0
        %s180 = scalar_select %p179, %s17, 0
        %s181 = smul.addr %s178, 4
        %s182 = sadd.s32 %s180, %s181
        %s183 = smul.addr %s182, 8
        %s184 = scalar_lea.vmem %s2, %s183
      $region28: #{adaptive_weighted_loss.1} parent=15 // pred_fallthru
        _
    $region16: #{adaptive_weighted_loss.1} parent=5 // pred_fallthru
      _
    %p185 = scmp.le.s32.totalorder 1, %s9
    %p186 = scmp.lt.s32.totalorder %s9, 3
    %p187 = pnand %p185, %p186
    %p188 = pneg %p187
    // Predicated region
    $region29: #{adaptive_weighted_loss.1} parent=5 // pred_check
      _
    $region30: #{adaptive_weighted_loss.1} parent=5 // pred_check_branch
      %190 = sbr.rel (%p187) target = $region32
    $region31: #{adaptive_weighted_loss.1} parent=5 // pred_region
      %s191 = ssub.s32 %s9, 1
      %p192 = scmp.lt.s32.totalorder %s18, 1
      %s193 = scalar_select %p192, %s18, 1
      %p194 = scmp.lt.s32.totalorder %s19, 0
      %s195 = scalar_select %p194, %s19, 0
      %s196 = smul.addr %s193, 4
      %s197 = sadd.s32 %s195, %s196
      %s198 = smul.addr %s197, 8
      %s199 = scalar_lea.vmem %s0, %s198
      %p200 = pneg %p49
      %p201 = pneg %p46
      %p202 = scmp.lt.s32.totalorder %s18, 1
      %s203 = scalar_select %p202, %s18, 1
      %p204 = scmp.lt.s32.totalorder %s19, 0
      %s205 = scalar_select %p204, %s19, 0
      %s206 = smul.addr %s203, 4
      %s207 = sadd.s32 %s205, %s206
      %s208 = smul.addr %s207, 8
      %s209 = scalar_lea.vmem %s1, %s208
      %p210 = pneg %p77
      %p211 = pneg %p74
      %p212 = scmp.lt.s32.totalorder %s18, 1
      %s213 = scalar_select %p212, %s18, 1
      %p214 = scmp.lt.s32.totalorder %s19, 0
      %s215 = scalar_select %p214, %s19, 0
      %s216 = smul.addr %s213, 4
      %s217 = sadd.s32 %s215, %s216
      %s218 = smul.addr %s217, 8
      %s219 = scalar_lea.vmem %s2, %s218
      %p220 = pneg %p105
      %p221 = pneg %p102
      %p222 = pneg %p133
      %p223 = pneg %p130
      %p224 = scmp.lt.s32.totalorder %s18, 1
      %s225 = scalar_select %p224, %s18, 1
      %p226 = scmp.lt.s32.totalorder %s19, 0
      %s227 = scalar_select %p226, %s19, 0
      %s228 = smul.addr %s227, 3
      %s229 = smul.addr %s225, 3
      %s230 = sadd.s32 %s228, %s229
      %s231 = smul.addr %s230, 8
      %s232 = scalar_lea.vmem %s3, %s231
      %p233 = scmp.lt.s32.totalorder %s18, 1
      %s234 = scalar_select %p233, %s18, 1
      %p235 = scmp.lt.s32.totalorder %s19, 0
      %s236 = scalar_select %p235, %s19, 0
      %s237 = smul.addr %s234, 4
      %s238 = sadd.s32 %s236, %s237
      %s239 = smul.addr %s238, 8
      %s240 = scalar_lea.vmem %s0, %s239
      %p241 = scmp.lt.s32.totalorder %s18, 1
      %s242 = scalar_select %p241, %s18, 1
      %p243 = scmp.lt.s32.totalorder %s19, 0
      %s244 = scalar_select %p243, %s19, 0
      %s245 = smul.addr %s242, 4
      %s246 = sadd.s32 %s244, %s245
      %s247 = smul.addr %s246, 8
      %s248 = scalar_lea.vmem %s1, %s247
      %p249 = scmp.lt.s32.totalorder %s18, 1
      %s250 = scalar_select %p249, %s18, 1
      %p251 = scmp.lt.s32.totalorder %s19, 0
      %s252 = scalar_select %p251, %s19, 0
      %s253 = smul.addr %s250, 4
      %s254 = sadd.s32 %s252, %s253
      %s255 = smul.addr %s254, 8
      %s256 = scalar_lea.vmem %s2, %s255
      %p257 = scmp.lt.s32.totalorder %s18, 1
      %s258 = scalar_select %p257, %s18, 1
      %p259 = scmp.lt.s32.totalorder %s19, 0
      %s260 = scalar_select %p259, %s19, 0
      %s261 = smul.addr %s260, 3
      %s262 = smul.addr %s258, 3
      %s263 = sadd.s32 %s261, %s262
      %s264 = smul.addr %s263, 8
      %s265 = scalar_lea.vmem %s3, %s264
      %v266 = vld [vmem:[%s240] sm:$0xff]
      %v267 = vld [vmem:[%s248] sm:$0xff]
      %v268 = vld [vmem:[%s256] sm:$0xff]
      %s269 = scalar_lea.vmem %s240, 8
      %v270 = vld [vmem:[%s269] sm:$0xff]
      %v271 = vmax.f32 %v266, %v270
      %s272 = scalar_lea.vmem %s248, 8
      %v273 = vld [vmem:[%s272] sm:$0xff]
      %vm274 = vcmp.gt.f32.partialorder %v273, %v267
      %v275 = vsel %vm274, %v273, %v267
      %v276 = vsel %vm274, 1, 0
      %s277 = scalar_lea.vmem %s256, 8
      %v278 = vld [vmem:[%s277] sm:$0xff]
      %vm279 = vcmp.gt.f32.partialorder %v278, %v268
      %v280 = vsel %vm279, %v278, %v268
      %v281 = vsel %vm279, 1, 0
      %s282 = scalar_lea.vmem %s240, 16
      %v283 = vld [vmem:[%s282] sm:$0xff]
      %v284 = vmax.f32 %v271, %v283
      %s285 = scalar_lea.vmem %s248, 16
      %v286 = vld [vmem:[%s285] sm:$0xff]
      %vm287 = vcmp.gt.f32.partialorder %v286, %v275
      %v288 = vsel %vm287, %v286, %v275
      %v289 = vsel %vm287, 2, %v276
      %s290 = scalar_lea.vmem %s256, 16
      %v291 = vld [vmem:[%s290] sm:$0xff]
      %vm292 = vcmp.gt.f32.partialorder %v291, %v280
      %v293 = vsel %vm292, %v291, %v280
      %v294 = vsel %vm292, 2, %v281
      %s295 = scalar_lea.vmem %s240, 24
      %v296 = vld [vmem:[%s295] sm:$0xff]
      %v297 = vmax.f32 %v284, %v296
      %s298 = scalar_lea.vmem %s248, 24
      %v299 = vld [vmem:[%s298] sm:$0xff]
      %vm300 = vcmp.gt.f32.partialorder %v299, %v288
      %v301 = vsel %vm300, %v299, %v288
      %v302 = vsel %vm300, 3, %v289
      %s303 = scalar_lea.vmem %s256, 24
      %v304 = vld [vmem:[%s303] sm:$0xff]
      %vm305 = vcmp.gt.f32.partialorder %v304, %v293
      %v306 = vsel %vm305, %v304, %v293
      %v307 = vsel %vm305, 3, %v294
      %v308 = vsub.f32 %v266, %v297
      %v309 = vmul.f32 %v308, 1.442695
      %v310 = vpow.pop %v309
      %v311 = vadd.f32 %v310, 0.0
      %v312 = vsub.f32 %v267, %v301
      %v313 = vmul.f32 %v312, 1.442695
      %v314 = vpow.pop %v313
      %v315 = vadd.f32 %v314, 0.0
      %v316 = vsub.f32 %v268, %v306
      %v317 = vmul.f32 %v316, 1.442695
      %v318 = vpow.pop %v317
      %v319 = vadd.f32 %v318, 0.0
      %v320 = vsub.f32 %v270, %v297
      %v321 = vmul.f32 %v320, 1.442695
      %v322 = vpow.pop %v321
      %v323 = vadd.f32 %v311, %v322
      %v324 = vsub.f32 %v273, %v301
      %v325 = vmul.f32 %v324, 1.442695
      %v326 = vpow.pop %v325
      %v327 = vadd.f32 %v315, %v326
      %v328 = vsub.f32 %v278, %v306
      %v329 = vmul.f32 %v328, 1.442695
      %v330 = vpow.pop %v329
      %v331 = vadd.f32 %v319, %v330
      %v332 = vsub.f32 %v283, %v297
      %v333 = vmul.f32 %v332, 1.442695
      %v334 = vpow.pop %v333
      %v335 = vadd.f32 %v323, %v334
      %v336 = vsub.f32 %v286, %v301
      %v337 = vmul.f32 %v336, 1.442695
      %v338 = vpow.pop %v337
      %v339 = vadd.f32 %v327, %v338
      %v340 = vsub.f32 %v291, %v306
      %v341 = vmul.f32 %v340, 1.442695
      %v342 = vpow.pop %v341
      %v343 = vadd.f32 %v331, %v342
      %v344 = vsub.f32 %v296, %v297
      %v345 = vmul.f32 %v344, 1.442695
      %v346 = vpow.pop %v345
      %v347 = vadd.f32 %v335, %v346
      %v348 = vsub.f32 %v299, %v301
      %v349 = vmul.f32 %v348, 1.442695
      %v350 = vpow.pop %v349
      %v351 = vadd.f32 %v339, %v350
      %v352 = vsub.f32 %v304, %v306
      %v353 = vmul.f32 %v352, 1.442695
      %v354 = vpow.pop %v353
      %v355 = vadd.f32 %v343, %v354
      %v356 = vrcp.pop %v351
      %v357 = vmul.f32 1.0, %v356
      %v358 = vrcp.pop %v355
      %v359 = vmul.f32 1.0, %v358
      %v360 = vlog2.pop %v347
      %v361 = vmul.f32 %v360, 0.6931472
      %v362 = vadd.f32 %v297, %v361
      %v363 = vmul.f32 %v314, %v357
      %v364 = vmul.f32 %v318, %v359
      %v365 = vadd.f32 %v363, %v364
      %v366 = vmul.f32 %v326, %v357
      %v367 = vmul.f32 %v330, %v359
      %v368 = vadd.f32 %v366, %v367
      %vm369 = vcmp.gt.f32.partialorder %v368, %v365
      %v370 = vsel %vm369, %v368, %v365
      %v371 = vsel %vm369, %v270, %v266
      %v372 = vmul.f32 %v338, %v357
      %v373 = vmul.f32 %v342, %v359
      %v374 = vadd.f32 %v372, %v373
      %vm375 = vcmp.gt.f32.partialorder %v374, %v370
      %v376 = vsel %vm375, %v374, %v370
      %v377 = vsel %vm375, %v283, %v371
      %v378 = vmul.f32 %v350, %v357
      %v379 = vmul.f32 %v354, %v359
      %v380 = vadd.f32 %v378, %v379
      %vm381 = vcmp.gt.f32.partialorder %v380, %v376
      %v382 = vsel %vm381, %v296, %v377
      %v383 = vsub.f32 %v362, %v382
      %vm384 = vcmp.gt.s32.totalorder %v302, 0
      %vm385 = vcmp.eq.s32.totalorder %v302, %v307
      %vm386 = vmand %vm384, %vm385
      %v387 = vsel %vm386, 1, 0
      %v388 = vcvt.s32.f32 %v387
      %vm389 = vcmp.gt.s32.totalorder %v307, 0
      %vm390 = vmor %vm384, %vm389
      %v391 = vsel %vm390, 1, 0
      %v392 = vcvt.s32.f32 %v391
      %v393 = vlaneseq
      %v394 = vshrl.u32 %v393, 7
      %v395 = vlaneseq
      %v396 = vand.u32 %v395, 127
      %s397 = smul.u32 %s19, 1024
      %v398 = vmul.u32 %v394, 128
      %v399 = vstv %s397
      %v400 = vadd.s32 %v399, %v398
      %v401 = vadd.s32 %v400, %v396
      %vm402 = vcmp.lt.s32.totalorder %v401, 256
      %v403 = vsel %vm402, 1, 0
      %v404 = vcvt.s32.f32 %v403
      %v405 = vmul.f32 %v383, %v404
      %v406 = vmul.f32 %v388, %v404
      %v407 = vmul.f32 %v392, %v404
      %v408 = vadd.f32 %v405, 0.0
      %409 = vst [vmem:[%s265] sm:$0xff] %v408
      %v410 = vadd.f32 %v406, 0.0
      %s411 = scalar_lea.vmem %s265, 8
      %412 = vst [vmem:[%s411] sm:$0xff] %v410
      %v413 = vadd.f32 %v407, 0.0
      %s414 = scalar_lea.vmem %s265, 16
      %415 = vst [vmem:[%s414] sm:$0xff] %v413
      %p416 = scmp.lt.s32.totalorder %s18, 1
      %s417 = scalar_select %p416, %s18, 1
      %p418 = scmp.lt.s32.totalorder %s19, 0
      %s419 = scalar_select %p418, %s19, 0
      %s420 = smul.addr %s419, 3
      %s421 = smul.addr %s417, 3
      %s422 = sadd.s32 %s420, %s421
      %s423 = smul.addr %s422, 8
      %s424 = scalar_lea.vmem %s3, %s423
      // Predicated region
      $region33: #{adaptive_weighted_loss.1} parent=31 // pred_check
        %p425 = pneg %p130
      $region34: #{adaptive_weighted_loss.1} parent=31 // pred_check_branch
        %427 = sbr.rel (%p425) target = $region36
      $region35: #{adaptive_weighted_loss.1} parent=31 // pred_region
        _
      $region36: #{adaptive_weighted_loss.1} parent=31 // pred_fallthru
        _
    $region32: #{adaptive_weighted_loss.1} parent=5 // pred_fallthru
      _
    %p428 = scmp.le.s32.totalorder 2, %s9
    // Predicated region
    $region37: #{adaptive_weighted_loss.1} parent=5 // pred_check
      %p429 = pneg %p428
    $region38: #{adaptive_weighted_loss.1} parent=5 // pred_check_branch
      %431 = sbr.rel (%p429) target = $region40
    $region39: #{adaptive_weighted_loss.1} parent=5 // pred_region
      %s432 = ssub.s32 %s9, 2
      // Predicated region
      $region41: #{adaptive_weighted_loss.1} parent=39 // pred_check
        %p433 = pneg %p136
      $region42: #{adaptive_weighted_loss.1} parent=39 // pred_check_branch
        %435 = sbr.rel (%p433) target = $region44
      $region43: #{adaptive_weighted_loss.1} parent=39 // pred_region
        %p436 = scmp.lt.s32.totalorder %s20, 1
        %s437 = scalar_select %p436, %s20, 1
        %p438 = scmp.lt.s32.totalorder %s21, 0
        %s439 = scalar_select %p438, %s21, 0
        %s440 = smul.addr %s439, 3
        %s441 = smul.addr %s437, 3
        %s442 = sadd.s32 %s440, %s441
        %s443 = smul.addr %s442, 8
        %s444 = scalar_lea.vmem %s3, %s443
      $region44: #{adaptive_weighted_loss.1} parent=39 // pred_fallthru
        _
    $region40: #{adaptive_weighted_loss.1} parent=5 // pred_fallthru
      _
  $region6: #{adaptive_weighted_loss.1} parent=0 // loop_footer
    %s13 = sadd.s32 1, %s9
  $region7: #{adaptive_weighted_loss.1} parent=0 // loop_footer_branch
    %8 = sbr.rel target = $region3
  $region8: #{adaptive_weighted_loss.1} parent=0 // loop_exit
    _

</llo_original>
